<compile_context>
chip_gen: v5e
topology: v5e:2x2
jax: 0.10.0
libtpu: 0.0.40
codegen_flags: <defaults>
</compile_context>

<pallas_src>
import functools

import jax
import jax.numpy as jnp
from jax.experimental import pallas as pl
from jax.experimental.pallas import tpu as pltpu


def _round_up(x, m):
    return ((x + m - 1) // m) * m


def _mlp_softmax_kernel(x_ref, w1_ref, b1_ref, w2_ref, b2_ref, w3_ref, b3_ref,
                        out_ref):
    """One batch-tile of the 2-hidden-layer MLP + exact softmax."""
    x = x_ref[...].astype(jnp.float32)

    # Hidden layer 1: Linear + tanh
    h1 = jnp.tanh(
        jnp.dot(x, w1_ref[...], preferred_element_type=jnp.float32)
        + b1_ref[...])

    # Hidden layer 2: Linear + tanh
    h2 = jnp.tanh(
        jnp.dot(h1, w2_ref[...], preferred_element_type=jnp.float32)
        + b2_ref[...])

    # Output layer: Linear (no output nonlinearity), real (unpadded) width.
    logits = (jnp.dot(h2, w3_ref[...], preferred_element_type=jnp.float32)
              + b3_ref[...])

    # Numerically stable, EXACT softmax along the feature axis.
    m = jnp.max(logits, axis=-1, keepdims=True)
    e = jnp.exp(logits - m)
    denom = jnp.sum(e, axis=-1, keepdims=True)
    out_ref[...] = (e / denom).astype(out_ref.dtype)


def _pick_tile_b(batch, tile_b):
    """Batch-tile size: multiple of 8 (or == batch), >=2 tiles when possible."""
    if batch <= 8:
        return batch                       # single block == full array (legal)
    tb = max(8, (min(tile_b, batch) // 8) * 8)
    if pl.cdiv(batch, tb) < 2:
        # Ensure >=2 grid tiles so v7x's two TensorCores both get work.
        tb = max(8, _round_up(pl.cdiv(batch, 2), 8))
    return tb


@functools.partial(jax.jit, static_argnames=("tile_b",))
def categorical_mlp_policy_forward(x, w1, b1, w2, b2, w3, b3, *, tile_b=4096):
    batch, obs_dim = x.shape
    hidden1 = w1.shape[1]
    hidden2 = w2.shape[1]
    action_dim = w3.shape[1]

    tb = _pick_tile_b(batch, tile_b)
    grid = (pl.cdiv(batch, tb),)

    # Weights/biases: constant block index => resident in VMEM, not re-DMAed.
    def resident(shape):
        return pl.BlockSpec(shape, lambda i: (0, 0))

    f32 = jnp.dtype(jnp.float32).itemsize
    weight_bytes = (w1.size + b1.size + w2.size + b2.size
                    + w3.size + b3.size) * f32
    vmem_bytes = int(
        2 * tb * obs_dim * f32                       # double-buffered input tiles
        + 2 * tb * action_dim * f32                  # double-buffered output tiles
        + weight_bytes                               # resident weights/biases
        + tb * (hidden1 + hidden2 + action_dim) * f32  # intermediates
        + (4 << 20))                                 # headroom
    vmem_bytes = max(vmem_bytes, 16 << 20)
    vmem_bytes = min(vmem_bytes, 32 << 20)           # stay within v7x scoped VMEM

    cost = pl.CostEstimate(
        flops=2 * batch * (obs_dim * hidden1 + hidden1 * hidden2
                           + hidden2 * action_dim),
        transcendentals=batch * (hidden1 + hidden2 + action_dim),
        bytes_accessed=int(batch * (obs_dim + action_dim) * f32 + weight_bytes),
    )

    return pl.pallas_call(
        _mlp_softmax_kernel,
        out_shape=jax.ShapeDtypeStruct((batch, action_dim), jnp.float32),
        grid=grid,
        in_specs=[
            pl.BlockSpec((tb, obs_dim), lambda i: (i, 0)),   # x: tiled on batch
            resident((obs_dim, hidden1)),
            resident((1, hidden1)),
            resident((hidden1, hidden2)),
            resident((1, hidden2)),
            resident((hidden2, action_dim)),
            resident((1, action_dim)),
        ],
        out_specs=pl.BlockSpec((tb, action_dim), lambda i: (i, 0)),
        compiler_params=pltpu.CompilerParams(
            dimension_semantics=("parallel",),   # shard batch across TCs on v7x
            vmem_limit_bytes=vmem_bytes,
        ),
        cost_estimate=cost,
    )(x, w1, b1, w2, b2, w3, b3)


def xavier_uniform(key, fan_in, fan_out, dtype=jnp.float32):
    # Matches torch.nn.init.xavier_uniform_ bound.
    bound = (6.0 / (fan_in + fan_out)) ** 0.5
    return jax.random.uniform(key, (fan_in, fan_out), dtype=dtype,
                              minval=-bound, maxval=bound)


def _reference(x, w1, b1, w2, b2, w3, b3):
    h1 = jnp.tanh(x @ w1 + b1)
    h2 = jnp.tanh(h1 @ w2 + b2)
    logits = h2 @ w3 + b3
    return jax.nn.softmax(logits, axis=1)


if __name__ == "__main__":
    # Small synthetic env spec: obs_dim=16, action_dim=8, hidden_sizes=(32, 32)
    obs_dim = 16
    action_dim = 8
    hidden = (32, 32)

    key = jax.random.PRNGKey(0)
    k_x, k_x2, k_x3, k_w1, k_w2, k_w3 = jax.random.split(key, 6)

    # Deterministic xavier-uniform weights, zero biases (hidden_b_init / output_b_init).
    w1 = xavier_uniform(k_w1, obs_dim, hidden[0])
    b1 = jnp.zeros((1, hidden[0]), jnp.float32)
    w2 = xavier_uniform(k_w2, hidden[0], hidden[1])
    b2 = jnp.zeros((1, hidden[1]), jnp.float32)
    w3 = xavier_uniform(k_w3, hidden[1], action_dim)
    b3 = jnp.zeros((1, action_dim), jnp.float32)

    # Case 1: tiny batch (single grid step, block == full array).
    x = jax.random.normal(k_x, (2, obs_dim), dtype=jnp.float32)
    probs = jax.block_until_ready(
        categorical_mlp_policy_forward(x, w1, b1, w2, b2, w3, b3))
    ref = _reference(x, w1, b1, w2, b2, w3, b3)
    assert probs.shape == (2, action_dim)
    assert jnp.allclose(probs, ref, atol=1e-4), "mismatch vs reference (batch=2)"
    assert jnp.allclose(jnp.sum(probs, axis=1), 1.0, atol=1e-5)

    # Case 2: exercise the batch grid (multiple pipelined tiles).
    x2 = jax.random.normal(k_x2, (24, obs_dim), dtype=jnp.float32)
    probs2 = jax.block_until_ready(
        categorical_mlp_policy_forward(x2, w1, b1, w2, b2, w3, b3, tile_b=8))
    ref2 = _reference(x2, w1, b1, w2, b2, w3, b3)
    assert probs2.shape == (24, action_dim)
    assert jnp.allclose(probs2, ref2, atol=1e-4), "mismatch vs reference (batch=24)"
    assert jnp.allclose(jnp.sum(probs2, axis=1), 1.0, atol=1e-5)

    # Case 3: ragged last block (batch not a multiple of the tile).
    x3 = jax.random.normal(k_x3, (20, obs_dim), dtype=jnp.float32)
    probs3 = jax.block_until_ready(
        categorical_mlp_policy_forward(x3, w1, b1, w2, b2, w3, b3, tile_b=16))
    ref3 = _reference(x3, w1, b1, w2, b2, w3, b3)
    assert probs3.shape == (20, action_dim)
    assert jnp.allclose(probs3, ref3, atol=1e-4), "mismatch vs reference (batch=20)"
    assert jnp.allclose(jnp.sum(probs3, axis=1), 1.0, atol=1e-5)

    # TODO(synk): Categorical sampling / log_prob / entropy (torch.distributions)
    # are distribution-object utilities, not part of the forward hot path; the
    # kernel returns the softmax probabilities that parameterize Categorical.
    print("KERNEL_OK")
</pallas_src>

<mosaic_0001>
module attributes {stable_mosaic.version = 11 : i64} {
  func.func @_mlp_softmax_kernel(%arg0: i32, %arg1: memref<2x16xf32, #tpu.memory_space<vmem>>, %arg2: memref<16x32xf32, #tpu.memory_space<vmem>>, %arg3: memref<1x32xf32, #tpu.memory_space<vmem>>, %arg4: memref<32x32xf32, #tpu.memory_space<vmem>>, %arg5: memref<1x32xf32, #tpu.memory_space<vmem>>, %arg6: memref<32x8xf32, #tpu.memory_space<vmem>>, %arg7: memref<1x8xf32, #tpu.memory_space<vmem>>, %arg8: memref<2x8xf32, #tpu.memory_space<vmem>>) attributes {dimension_semantics = [#tpu.dimension_semantics<parallel>], iteration_bounds = array<i64: 1>, scalar_prefetch = 0 : i64, scratch_operands = 0 : i64, tpu.core_type = #tpu.core_type<tc>, window_params = [{transform_indices = @transform_0, window_bounds = array<i64: 2, 16>}, {pipeline_mode = #tpu.pipeline_mode<synchronous>, transform_indices = @transform_1, window_bounds = array<i64: 16, 32>}, {pipeline_mode = #tpu.pipeline_mode<synchronous>, transform_indices = @transform_2, window_bounds = array<i64: 1, 32>}, {pipeline_mode = #tpu.pipeline_mode<synchronous>, transform_indices = @transform_3, window_bounds = array<i64: 32, 32>}, {pipeline_mode = #tpu.pipeline_mode<synchronous>, transform_indices = @transform_4, window_bounds = array<i64: 1, 32>}, {pipeline_mode = #tpu.pipeline_mode<synchronous>, transform_indices = @transform_5, window_bounds = array<i64: 32, 8>}, {pipeline_mode = #tpu.pipeline_mode<synchronous>, transform_indices = @transform_6, window_bounds = array<i64: 1, 8>}, {transform_indices = @transform_7, window_bounds = array<i64: 2, 8>}]} {
    %c0 = arith.constant 0 : index
    %c0_0 = arith.constant 0 : index
    %0 = vector.load %arg1[%c0, %c0_0] : memref<2x16xf32, #tpu.memory_space<vmem>>, vector<2x16xf32>
    %c0_1 = arith.constant 0 : index
    %c0_2 = arith.constant 0 : index
    %1 = vector.load %arg2[%c0_1, %c0_2] : memref<16x32xf32, #tpu.memory_space<vmem>>, vector<16x32xf32>
    %cst = arith.constant dense<0.000000e+00> : vector<2x32xf32>
    %2 = tpu.matmul %0, %1, %cst {dimension_numbers = #tpu.dot_dimension_numbers<[1], [0], [0], [1], [0, 0, 1, 1], [], []>} : vector<2x16xf32>, vector<16x32xf32>, vector<2x32xf32> -> vector<2x32xf32>
    %c0_3 = arith.constant 0 : index
    %c0_4 = arith.constant 0 : index
    %3 = vector.load %arg3[%c0_3, %c0_4] : memref<1x32xf32, #tpu.memory_space<vmem>>, vector<1x32xf32>
    %4 = vector.broadcast %3 : vector<1x32xf32> to vector<2x32xf32>
    %5 = arith.addf %2, %4 : vector<2x32xf32>
    %6 = math.tanh %5 : vector<2x32xf32>
    %c0_5 = arith.constant 0 : index
    %c0_6 = arith.constant 0 : index
    %7 = vector.load %arg4[%c0_5, %c0_6] : memref<32x32xf32, #tpu.memory_space<vmem>>, vector<32x32xf32>
    %cst_7 = arith.constant dense<0.000000e+00> : vector<2x32xf32>
    %8 = tpu.matmul %6, %7, %cst_7 {dimension_numbers = #tpu.dot_dimension_numbers<[1], [0], [0], [1], [0, 0, 1, 1], [], []>} : vector<2x32xf32>, vector<32x32xf32>, vector<2x32xf32> -> vector<2x32xf32>
    %c0_8 = arith.constant 0 : index
    %c0_9 = arith.constant 0 : index
    %9 = vector.load %arg5[%c0_8, %c0_9] : memref<1x32xf32, #tpu.memory_space<vmem>>, vector<1x32xf32>
    %10 = vector.broadcast %9 : vector<1x32xf32> to vector<2x32xf32>
    %11 = arith.addf %8, %10 : vector<2x32xf32>
    %12 = math.tanh %11 : vector<2x32xf32>
    %c0_10 = arith.constant 0 : index
    %c0_11 = arith.constant 0 : index
    %13 = vector.load %arg6[%c0_10, %c0_11] : memref<32x8xf32, #tpu.memory_space<vmem>>, vector<32x8xf32>
    %cst_12 = arith.constant dense<0.000000e+00> : vector<2x8xf32>
    %14 = tpu.matmul %12, %13, %cst_12 {dimension_numbers = #tpu.dot_dimension_numbers<[1], [0], [0], [1], [0, 0, 1, 1], [], []>} : vector<2x32xf32>, vector<32x8xf32>, vector<2x8xf32> -> vector<2x8xf32>
    %c0_13 = arith.constant 0 : index
    %c0_14 = arith.constant 0 : index
    %15 = vector.load %arg7[%c0_13, %c0_14] : memref<1x8xf32, #tpu.memory_space<vmem>>, vector<1x8xf32>
    %16 = vector.broadcast %15 : vector<1x8xf32> to vector<2x8xf32>
    %17 = arith.addf %14, %16 : vector<2x8xf32>
    %cst_15 = arith.constant dense<0xFF800000> : vector<2xf32>
    %18 = vector.multi_reduction <maximumf>, %17, %cst_15 [1] : vector<2x8xf32> to vector<2xf32>
    %19 = vector.shape_cast %18 : vector<2xf32> to vector<2x1xf32>
    %20 = vector.broadcast %19 : vector<2x1xf32> to vector<2x8xf32>
    %21 = arith.subf %17, %20 : vector<2x8xf32>
    %22 = math.exp %21 : vector<2x8xf32>
    %cst_16 = arith.constant dense<0.000000e+00> : vector<2xf32>
    %23 = vector.multi_reduction <add>, %22, %cst_16 [1] : vector<2x8xf32> to vector<2xf32>
    %24 = vector.shape_cast %23 : vector<2xf32> to vector<2x1xf32>
    %25 = vector.broadcast %24 : vector<2x1xf32> to vector<2x8xf32>
    %26 = arith.divf %22, %25 : vector<2x8xf32>
    %c0_17 = arith.constant 0 : index
    %c0_18 = arith.constant 0 : index
    %27 = vector.load %arg8[%c0_17, %c0_18] : memref<2x8xf32, #tpu.memory_space<vmem>>, vector<2x8xf32>
    tpu.vector_store %arg8[%c0_17, %c0_18], %26 {strides = array<i32>} : memref<2x8xf32, #tpu.memory_space<vmem>>, vector<2x8xf32>,
    return
  }
  func.func @transform_0(%arg0: i32) -> (i32, i32) {
    %c0_i32 = arith.constant 0 : i32
    %c0_i32_0 = arith.constant 0 : i32
    return %arg0, %c0_i32 : i32, i32
  }
  func.func @transform_1(%arg0: i32) -> (i32, i32) {
    %c0_i32 = arith.constant 0 : i32
    %c0_i32_0 = arith.constant 0 : i32
    %c0_i32_1 = arith.constant 0 : i32
    return %c0_i32, %c0_i32_0 : i32, i32
  }
  func.func @transform_2(%arg0: i32) -> (i32, i32) {
    %c0_i32 = arith.constant 0 : i32
    %c0_i32_0 = arith.constant 0 : i32
    %c0_i32_1 = arith.constant 0 : i32
    return %c0_i32, %c0_i32_0 : i32, i32
  }
  func.func @transform_3(%arg0: i32) -> (i32, i32) {
    %c0_i32 = arith.constant 0 : i32
    %c0_i32_0 = arith.constant 0 : i32
    %c0_i32_1 = arith.constant 0 : i32
    return %c0_i32, %c0_i32_0 : i32, i32
  }
  func.func @transform_4(%arg0: i32) -> (i32, i32) {
    %c0_i32 = arith.constant 0 : i32
    %c0_i32_0 = arith.constant 0 : i32
    %c0_i32_1 = arith.constant 0 : i32
    return %c0_i32, %c0_i32_0 : i32, i32
  }
  func.func @transform_5(%arg0: i32) -> (i32, i32) {
    %c0_i32 = arith.constant 0 : i32
    %c0_i32_0 = arith.constant 0 : i32
    %c0_i32_1 = arith.constant 0 : i32
    return %c0_i32, %c0_i32_0 : i32, i32
  }
  func.func @transform_6(%arg0: i32) -> (i32, i32) {
    %c0_i32 = arith.constant 0 : i32
    %c0_i32_0 = arith.constant 0 : i32
    %c0_i32_1 = arith.constant 0 : i32
    return %c0_i32, %c0_i32_0 : i32, i32
  }
  func.func @transform_7(%arg0: i32) -> (i32, i32) {
    %c0_i32 = arith.constant 0 : i32
    %c0_i32_0 = arith.constant 0 : i32
    return %arg0, %c0_i32 : i32, i32
  }
}

</mosaic_0001>

<llo_original>
// kernel: categorical_mlp_policy_forward.1
$region0: #{categorical_mlp_policy_forward.1}
  #allocation0 [shape = 'u32[]', space=smem, size = 0x4, offset = 0x4, fixed_abs, tag = 'smem constant byte address 0x4 - core index']
  #allocation1 [shape = 'u32[72,128]{1,0:T(1,128)}', space=vmem, size = 0x9000, scoped, tag = 'internal scratch']
  %s0 = inlined_call_operand.vmem [shape: f32[2,16], index: 0, kind: input, shape index: {}]
  %s1 = inlined_call_operand.hbm [shape: f32[16,32], index: 1, kind: input, shape index: {}]
  %s2 = inlined_call_operand.vmem [shape: f32[1,32], index: 2, kind: input, shape index: {}]
  %s3 = inlined_call_operand.vmem [shape: f32[32,32], index: 3, kind: input, shape index: {}]
  %s4 = inlined_call_operand.vmem [shape: f32[1,32], index: 4, kind: input, shape index: {}]
  %s5 = inlined_call_operand.vmem [shape: f32[32,8], index: 5, kind: input, shape index: {}]
  %s6 = inlined_call_operand.vmem [shape: f32[1,8], index: 6, kind: input, shape index: {}]
  %s7 = inlined_call_operand.hbm [shape: f32[2,8], index: 7, kind: output, shape index: {}]
  %s8 = sld [smem:[#allocation0]]
  $region42: #{categorical_mlp_policy_forward.1} parent=0
    _
  %s10 = ssub.s32 1, %s8
  %s11 = scalar_select 0, %s10, %s8
  $region1: #{categorical_mlp_policy_forward.1} parent=0
    #allocation2 [shape = 'u8[8192]{0}', space=vmem, size = 0x2000, scoped, tag = 'input window, operand 1, single buffered']
    #allocation3 [shape = 's32[1]{0}', space=sflag, size = 0x4, scoped, tag = 'scoped memory for categorical_mlp_policy_forward.1']
    #allocation4 [shape = 's32[1]{0}', space=sflag, size = 0x4, scoped, tag = 'scoped memory for categorical_mlp_policy_forward.1']
    #allocation5 [shape = 'u8[1024]{0}', space=vmem, size = 0x400, scoped, tag = 'output window, operand 0, single buffered']
    %12 = vsyncpa [#allocation3], 0
    %13 = vsyncpa [#allocation4], 0
    // Predicated region
    $region2: #{categorical_mlp_policy_forward.1} parent=1 // pred_check
      _
    $region3: #{categorical_mlp_policy_forward.1} parent=1 // pred_check_branch
      %15 = sbr.rel (0) target = $region5
    $region4: #{categorical_mlp_policy_forward.1} parent=1 // pred_region
      _
    $region5: #{categorical_mlp_policy_forward.1} parent=1 // pred_fallthru
      _
    // Predicated region
    $region6: #{categorical_mlp_policy_forward.1} parent=1 // pred_check
      _
    $region7: #{categorical_mlp_policy_forward.1} parent=1 // pred_check_branch
      %17 = sbr.rel (0) target = $region9
    $region8: #{categorical_mlp_policy_forward.1} parent=1 // pred_region
      %19 = vsyncadd [#allocation3], 0
      %s20 = sshll.u32 %s1, 4
      %s21 = int_to_ptr.hbm [resolvable:$true] %s20
      %s22 = sshll.u32 [#allocation2], 4
      %s23 = int_to_ptr.vmem [resolvable:$true] %s22
      %28 = dma.hbm_to_vmem [thread:$0]  %s21, 256, %s23, [#allocation3], 128, 128, 8
    $region9: #{categorical_mlp_policy_forward.1} parent=1 // pred_fallthru
      _
    // Predicated region
    $region10: #{categorical_mlp_policy_forward.1} parent=1 // pred_check
      _
    $region11: #{categorical_mlp_policy_forward.1} parent=1 // pred_check_branch
      %30 = sbr.rel (0) target = $region13
    $region12: #{categorical_mlp_policy_forward.1} parent=1 // pred_region
      _
    $region13: #{categorical_mlp_policy_forward.1} parent=1 // pred_fallthru
      _
    // Predicated region
    $region14: #{categorical_mlp_policy_forward.1} parent=1 // pred_check
      _
    $region15: #{categorical_mlp_policy_forward.1} parent=1 // pred_check_branch
      %32 = sbr.rel (0) target = $region17
    $region16: #{categorical_mlp_policy_forward.1} parent=1 // pred_region
      _
    $region17: #{categorical_mlp_policy_forward.1} parent=1 // pred_fallthru
      _
    // Predicated region
    $region18: #{categorical_mlp_policy_forward.1} parent=1 // pred_check
      _
    $region19: #{categorical_mlp_policy_forward.1} parent=1 // pred_check_branch
      %34 = sbr.rel (0) target = $region21
    $region20: #{categorical_mlp_policy_forward.1} parent=1 // pred_region
      _
    $region21: #{categorical_mlp_policy_forward.1} parent=1 // pred_fallthru
      _
    // Predicated region
    $region22: #{categorical_mlp_policy_forward.1} parent=1 // pred_check
      _
    $region23: #{categorical_mlp_policy_forward.1} parent=1 // pred_check_branch
      %36 = sbr.rel (0) target = $region25
    $region24: #{categorical_mlp_policy_forward.1} parent=1 // pred_region
      _
    $region25: #{categorical_mlp_policy_forward.1} parent=1 // pred_fallthru
      _
    // Predicated region
    $region26: #{categorical_mlp_policy_forward.1} parent=1 // pred_check
      _
    $region27: #{categorical_mlp_policy_forward.1} parent=1 // pred_check_branch
      %38 = sbr.rel (0) target = $region29
    $region28: #{categorical_mlp_policy_forward.1} parent=1 // pred_region
      _
    $region29: #{categorical_mlp_policy_forward.1} parent=1 // pred_fallthru
      _
    // Predicated region
    $region30: #{categorical_mlp_policy_forward.1} parent=1 // pred_check
      _
    $region31: #{categorical_mlp_policy_forward.1} parent=1 // pred_check_branch
      %40 = sbr.rel (0) target = $region33
    $region32: #{categorical_mlp_policy_forward.1} parent=1 // pred_region
      %42 = dma.done [#allocation3], 256
    $region33: #{categorical_mlp_policy_forward.1} parent=1 // pred_fallthru
      _
    %v43 = vld [vmem:[%s0] sm:$0x3]
    %v44 = vld [vmem:[#allocation2] sm:$0xff]
    %v45 = vld [vmem:[#allocation2 + $0x8] sm:$0xff]
    %v46 = vld [vmem:[%s2] sm:$0x1]
    %v48 = vperm.slane %v46, 0
    %vm50 = vcmask 130048
    %v52 = vsel %vm50, %v43, 0
    %54 = vmatpush.msra.mxu0 0.0
    %55 = vmatpush.msra.mxu0 0.0
    %56 = vmatpush.msra.mxu0 0.0
    %57 = vmatpush.msra.mxu0 0.0
    %58 = vmatpush.msra.mxu0 0.0
    %59 = vmatpush.msra.mxu0 0.0
    %60 = vmatpush.msra.mxu0 0.0
    %61 = vmatpush.msra.mxu0 0.0
    %62 = vmatpush.msra.mxu0 0.0
    %63 = vmatpush.msra.mxu0 0.0
    %64 = vmatpush.msra.mxu0 0.0
    %65 = vmatpush.msra.mxu0 0.0
    %66 = vmatpush.msra.mxu0 0.0
    %67 = vmatpush.msra.mxu0 0.0
    %68 = vmatpush.msra.mxu0 %v45
    %69 = vmatpush.msra.mxu0 %v44
    %70 = vmatmul.f32.gmra.mxu0 %v52
    %v71 = vpop.f32.mrf.mxu0
    %v72 = vadd.f32 %v48, %v71
    %73 = vdwg.mxu0
    %v74 = vtanh.pop %v72
    %v75 = vld [vmem:[%s3] sm:$0xff]
    %v76 = vld [vmem:[%s3 + $0x8] sm:$0xff]
    %v77 = vld [vmem:[%s3 + $0x10] sm:$0xff]
    %v78 = vld [vmem:[%s3 + $0x18] sm:$0xff]
    %v79 = vld [vmem:[%s4] sm:$0x1]
    %v81 = vperm.slane %v79, 0
    %vm83 = vcmask 261120
    %v85 = vsel %vm83, %v74, 0
    %87 = vmatpush.msra.mxu0 0.0
    %88 = vmatpush.msra.mxu0 0.0
    %89 = vmatpush.msra.mxu0 0.0
    %90 = vmatpush.msra.mxu0 0.0
    %91 = vmatpush.msra.mxu0 0.0
    %92 = vmatpush.msra.mxu0 0.0
    %93 = vmatpush.msra.mxu0 0.0
    %94 = vmatpush.msra.mxu0 0.0
    %95 = vmatpush.msra.mxu0 0.0
    %96 = vmatpush.msra.mxu0 0.0
    %97 = vmatpush.msra.mxu0 0.0
    %98 = vmatpush.msra.mxu0 0.0
    %99 = vmatpush.msra.mxu0 %v78
    %100 = vmatpush.msra.mxu0 %v77
    %101 = vmatpush.msra.mxu0 %v76
    %102 = vmatpush.msra.mxu0 %v75
    %103 = vmatmul.f32.gmra.mxu0 %v85
    %v104 = vpop.f32.mrf.mxu0
    %v105 = vadd.f32 %v81, %v104
    %106 = vdwg.mxu0
    %v107 = vtanh.pop %v105
    %v108 = vld [vmem:[%s5] sm:$0xff]
    %v109 = vld [vmem:[%s5 + $0x8] sm:$0xff]
    %v110 = vld [vmem:[%s5 + $0x10] sm:$0xff]
    %v111 = vld [vmem:[%s5 + $0x18] sm:$0xff]
    %v112 = vld [vmem:[%s6] sm:$0x1]
    %v114 = vperm.slane %v112, 0
    %v117 = vsel %vm83, %v107, 0
    %119 = vmatpush.msra.mxu0 0.0
    %120 = vmatpush.msra.mxu0 0.0
    %121 = vmatpush.msra.mxu0 0.0
    %122 = vmatpush.msra.mxu0 0.0
    %123 = vmatpush.msra.mxu0 0.0
    %124 = vmatpush.msra.mxu0 0.0
    %125 = vmatpush.msra.mxu0 0.0
    %126 = vmatpush.msra.mxu0 0.0
    %127 = vmatpush.msra.mxu0 0.0
    %128 = vmatpush.msra.mxu0 0.0
    %129 = vmatpush.msra.mxu0 0.0
    %130 = vmatpush.msra.mxu0 0.0
    %131 = vmatpush.msra.mxu0 %v111
    %132 = vmatpush.msra.mxu0 %v110
    %133 = vmatpush.msra.mxu0 %v109
    %134 = vmatpush.msra.mxu0 %v108
    %135 = vmatmul.f32.gmra.mxu0 %v117
    %v136 = vpop.f32.mrf.mxu0
    %v137 = vadd.f32 %v114, %v136
    %138 = vdwg.mxu0
    %vm139 = vcmask 58368
    %v140 = vsel %vm139, %v137, -inf
    %141 = vmax.xlane.f32.xlu0 %v140
    %v142 = vpop.xlane.xlu0 %141
    %v143 = vsub.f32 %v137, %v142
    %v144 = vmul.f32 %v143, 1.442695
    %v145 = vpow.pop %v144
    %v146 = vsel %vm139, %v145, 0.0
    %147 = vadd.xlane.f32.xlu0 %v146
    %v148 = vpop.xlane.xlu0 %147
    %v149 = vrcp.pop %v148
    %v150 = vmul.f32 %v148, %v149
    %v151 = vsub.f32 1.0, %v150
    %v152 = vmul.f32 %v149, %v151
    %v153 = vadd.f32 %v149, %v152
    %vm154 = vweird.f32 %v148
    %vm155 = vweird.f32 %v149
    %vm156 = vmor %vm154, %vm155
    %v157 = vsel %vm156, %v149, %v153
    %v158 = vand.u32 2147483647, %v148
    %vm159 = vcmp.eq.f32.partialorder %v158, 8.507059e+37
    %v160 = vand.u32 %v148, 2147483648
    %v161 = vor.u32 1.1754944e-38, %v160
    %v162 = vsel %vm159, %v161, %v157
    %v163 = vmul.f32 %v145, %v162
    %164 = vst.msk [vmem:[#allocation5] sm:$0x3] %vm139, %v163
    // Predicated region
    $region34: #{categorical_mlp_policy_forward.1} parent=1 // pred_check
      _
    $region35: #{categorical_mlp_policy_forward.1} parent=1 // pred_check_branch
      %166 = sbr.rel (0) target = $region37
    $region36: #{categorical_mlp_policy_forward.1} parent=1 // pred_region
      %168 = vsyncadd [#allocation4], 0
      %s170 = sshll.u32 [#allocation5], 4
      %s171 = int_to_ptr.vmem [resolvable:$true] %s170
      %s172 = sshll.u32 %s7, 4
      %s173 = int_to_ptr.hbm [resolvable:$true] %s172
      %175 = dma.vmem_to_hbm [thread:$0]  %s171, 32, %s173, [#allocation4]
    $region37: #{categorical_mlp_policy_forward.1} parent=1 // pred_fallthru
      _
    // Predicated region
    $region38: #{categorical_mlp_policy_forward.1} parent=1 // pred_check
      _
    $region39: #{categorical_mlp_policy_forward.1} parent=1 // pred_check_branch
      %177 = sbr.rel (0) target = $region41
    $region40: #{categorical_mlp_policy_forward.1} parent=1 // pred_region
      %179 = dma.done [#allocation4], 32
    $region41: #{categorical_mlp_policy_forward.1} parent=1 // pred_fallthru
      _
    %180 = vsyncpa [#allocation3], 1
    %181 = vsyncpa [#allocation4], 1

</llo_original>
